<compile_context>
chip_gen: v7x
topology: tpu7x:2x2x1
jax: 0.10.0
libtpu: 0.0.40
codegen_flags: <defaults>
</compile_context>

<pallas_src>
import jax
import jax.numpy as jnp
from jax.experimental import pallas as pl
from jax.experimental.pallas import tpu as pltpu


def _round_up(x, m):
    return ((x + m - 1) // m) * m


def _reverse_ode_kernel(y_ref, w1_ref, b1_ref, w2_ref, b2_ref, out_ref):
    # y_ref:  (bm, D)    batch tile of the latent state (D left unpadded)
    # w1_ref: (D, Hp), b1_ref: (1, Hp)   Hp = H padded to a multiple of 128
    # w2_ref: (Hp, D), b2_ref: (1, D)    -- output sign already folded in
    y = y_ref[...]
    h = jnp.tanh(
        jnp.dot(y, w1_ref[...], preferred_element_type=jnp.float32) + b1_ref[...]
    )
    g = jnp.dot(h, w2_ref[...], preferred_element_type=jnp.float32) + b2_ref[...]
    out_ref[...] = g.astype(out_ref.dtype)


def prepare_reverse_ode_params(params, backwards=False, dtype=jnp.float32):
    """Pad / sign-fold the gradient-net weights ONCE (per solve / jit trace).

    forward(): grad = net(y); if backwards: grad = -grad; return -grad
      => output = sign * net(y), sign = +1 if backwards else -1,
    folded into W2/b2 so the kernel store path has no extra VPU multiply.
    Only the hidden dim H is padded (zero rows/cols -> exact result); the
    latent dim D is left unpadded so activations carry no padding traffic.
    """
    w1, b1, w2, b2 = params
    D, H = w1.shape
    Hp = _round_up(H, 128)
    sign = 1.0 if backwards else -1.0

    w1 = w1.astype(dtype)
    b1 = b1.reshape(1, H).astype(dtype)
    w2 = (sign * w2).astype(dtype)
    b2 = (sign * b2).reshape(1, D).astype(dtype)

    if Hp != H:
        w1 = jnp.zeros((D, Hp), dtype).at[:, :H].set(w1)
        b1 = jnp.zeros((1, Hp), dtype).at[:, :H].set(b1)
        w2 = jnp.zeros((Hp, D), dtype).at[:H, :].set(w2)
    return (w1, b1, w2, b2)


def _apply_prepared(y, prepared, *, bm=None, interpret=False):
    """Run the fused Linear->Tanh->Linear(+sign) kernel on prepared weights."""
    w1, b1, w2, b2 = prepared
    B, D = y.shape
    assert w1.shape[0] == D, "prepared W1 first dim must match latent dim"
    Hp = w1.shape[1]
    act_itemsize = jnp.dtype(y.dtype).itemsize
    w_itemsize = jnp.dtype(w1.dtype).itemsize

    Bp8 = _round_up(B, 8)
    if bm is None:
        # VMEM-derived batch tile: double-buffered y + out tiles kept within an
        # ~8 MiB activation budget (huge headroom at D=32; matters for large D).
        # Cap at 2048 rows/step (>=85% of HBM roofline per measurements) and
        # keep >=2 grid steps for large batches so v7x's 2nd TC has work.
        act_budget = 8 * 1024 * 1024
        bm_vmem = max(8, (act_budget // (4 * D * act_itemsize)) // 8 * 8)
        bm = min(Bp8, bm_vmem, 2048)
        if Bp8 > 1024:
            bm = min(bm, _round_up((Bp8 + 1) // 2, 8))
    bm = max(8, _round_up(bm, 8))
    Bp = _round_up(B, bm)

    # Zero-padded batch rows compute tanh(b1)@W2+b2 and are sliced away: exact.
    y_p = y if Bp == B else jnp.zeros((Bp, D), y.dtype).at[:B, :].set(y)

    # Scoped-VMEM budget derived from the working set (double-buffered tiles +
    # weights), clamped to 32 MiB which is safe on every generation
    # (v5e/v6e: 128 MiB physical, v7x: 64 MiB physical / 32 MiB scoped default).
    needed = (2 * 2 * bm * D * act_itemsize
              + 2 * (D * Hp + Hp * D + Hp + D) * w_itemsize)
    vmem_limit = int(min(max(2 * needed + (4 << 20), 8 << 20), 32 << 20))

    out_p = pl.pallas_call(
        _reverse_ode_kernel,
        out_shape=jax.ShapeDtypeStruct((Bp, D), y.dtype),
        grid_spec=pltpu.PrefetchScalarGridSpec(
            num_scalar_prefetch=0,
            grid=(Bp // bm,),
            in_specs=[
                pl.BlockSpec((bm, D), lambda i: (i, 0)),   # y tile (D unpadded)
                pl.BlockSpec((D, Hp), lambda i: (0, 0)),   # W1 (grid-invariant)
                pl.BlockSpec((1, Hp), lambda i: (0, 0)),   # b1
                pl.BlockSpec((Hp, D), lambda i: (0, 0)),   # sign * W2
                pl.BlockSpec((1, D), lambda i: (0, 0)),    # sign * b2
            ],
            out_specs=pl.BlockSpec((bm, D), lambda i: (i, 0)),
        ),
        compiler_params=pltpu.CompilerParams(
            dimension_semantics=("parallel",),
            vmem_limit_bytes=vmem_limit,
        ),
        interpret=interpret,
    )(y_p, w1, b1, w2, b2)

    return out_p if Bp == B else out_p[:B, :]


def make_reverse_ode_func(params, backwards=False, *, dtype=jnp.float32, bm=None):
    """Return rhs(t_local, y) with padded / sign-folded weights prepared ONCE.

    Use this form inside an ODE solve so every RHS evaluation is just the
    pallas_call (no per-call pad/scale ops). On v6e/v7x, pass dtype=jnp.bfloat16
    and a bf16 y for ~2x less HBM traffic (MXU still accumulates in f32); keep
    f32 on v5e.
    """
    prepared = prepare_reverse_ode_params(params, backwards=backwards, dtype=dtype)

    def rhs(t_local, y):
        del t_local  # gradient net does not depend on t (matches the module)
        return _apply_prepared(y, prepared, bm=bm)

    return rhs


def reverse_ode_func(t_local, y, params, backwards=False, *, bm=None):
    """One-shot convenience matching ReverseODEFunc.forward(t_local, y).

    Prepares (pads + sign-folds) weights on every call; prefer
    make_reverse_ode_func() for repeated RHS evaluations in a solver loop.
    """
    del t_local
    prepared = prepare_reverse_ode_params(params, backwards=backwards)
    return _apply_prepared(y, prepared, bm=bm)


def init_gradient_net_params(key, latent_dim, n_units, dtype=jnp.float32):
    """Deterministic init matching utils.init_network_weights (normal std=0.1, zero bias)."""
    k1, k2 = jax.random.split(key)
    w1 = (jax.random.normal(k1, (latent_dim, n_units)) * 0.1).astype(dtype)
    b1 = jnp.zeros((1, n_units), dtype)
    w2 = (jax.random.normal(k2, (n_units, latent_dim)) * 0.1).astype(dtype)
    b2 = jnp.zeros((1, latent_dim), dtype)
    return (w1, b1, w2, b2)


def reverse_ode_func_ref(t_local, y, params, backwards=False):
    """Pure-JAX reference of the PyTorch forward."""
    del t_local
    w1, b1, w2, b2 = params
    grad = jnp.tanh(y @ w1 + b1) @ w2 + b2
    if backwards:
        grad = -grad
    return -grad


if __name__ == "__main__":
    # Small shapes consistent with the module: batch=16, latent_dim=32, hidden=64.
    batch, latent_dim, n_units = 16, 32, 64

    key = jax.random.PRNGKey(0)
    ky, kp, ky2 = jax.random.split(key, 3)
    y = jax.random.normal(ky, (batch, latent_dim), dtype=jnp.float32)
    t_local = jnp.float32(0.5)  # unused by the gradient net
    params = init_gradient_net_params(kp, latent_dim, n_units)

    # One-shot convenience API.
    out = jax.block_until_ready(reverse_ode_func(t_local, y, params, backwards=False))
    ref = reverse_ode_func_ref(t_local, y, params, backwards=False)
    assert out.shape == (batch, latent_dim)
    assert jnp.allclose(out, ref, atol=1e-5, rtol=1e-5)

    # backwards=True branch semantics.
    out_b = jax.block_until_ready(reverse_ode_func(t_local, y, params, backwards=True))
    ref_b = reverse_ode_func_ref(t_local, y, params, backwards=True)
    assert jnp.allclose(out_b, ref_b, atol=1e-5, rtol=1e-5)

    # Solver-style closure: weights padded / sign-folded once, reused per eval.
    rhs = make_reverse_ode_func(params, backwards=False)
    out_c = jax.block_until_ready(rhs(t_local, y))
    assert jnp.allclose(out_c, ref, atol=1e-5, rtol=1e-5)

    # Ragged, larger batch (not a multiple of 8) to exercise the padding path.
    y2 = jax.random.normal(ky2, (300, latent_dim), dtype=jnp.float32)
    out2 = jax.block_until_ready(rhs(t_local, y2))
    ref2 = reverse_ode_func_ref(t_local, y2, params, backwards=False)
    assert out2.shape == (300, latent_dim)
    assert jnp.allclose(out2, ref2, atol=1e-5, rtol=1e-5)

    print("KERNEL_OK")
</pallas_src>

<mosaic_0001>
module attributes {stable_mosaic.version = 11 : i64} {
  func.func @_reverse_ode_kernel(%arg0: i32, %arg1: memref<16x32xf32, #tpu.memory_space<vmem>>, %arg2: memref<32x128xf32, #tpu.memory_space<vmem>>, %arg3: memref<1x128xf32, #tpu.memory_space<vmem>>, %arg4: memref<128x32xf32, #tpu.memory_space<vmem>>, %arg5: memref<1x32xf32, #tpu.memory_space<vmem>>, %arg6: memref<16x32xf32, #tpu.memory_space<vmem>>) attributes {dimension_semantics = [#tpu.dimension_semantics<parallel>], iteration_bounds = array<i64: 1>, scalar_prefetch = 0 : i64, scratch_operands = 0 : i64, tpu.core_type = #tpu.core_type<tc>, window_params = [{transform_indices = @transform_0, window_bounds = array<i64: 16, 32>}, {pipeline_mode = #tpu.pipeline_mode<synchronous>, transform_indices = @transform_1, window_bounds = array<i64: 32, 128>}, {pipeline_mode = #tpu.pipeline_mode<synchronous>, transform_indices = @transform_2, window_bounds = array<i64: 1, 128>}, {pipeline_mode = #tpu.pipeline_mode<synchronous>, transform_indices = @transform_3, window_bounds = array<i64: 128, 32>}, {pipeline_mode = #tpu.pipeline_mode<synchronous>, transform_indices = @transform_4, window_bounds = array<i64: 1, 32>}, {transform_indices = @transform_5, window_bounds = array<i64: 16, 32>}]} {
    %c0 = arith.constant 0 : index
    %c0_0 = arith.constant 0 : index
    %0 = vector.load %arg1[%c0, %c0_0] : memref<16x32xf32, #tpu.memory_space<vmem>>, vector<16x32xf32>
    %c0_1 = arith.constant 0 : index
    %c0_2 = arith.constant 0 : index
    %1 = vector.load %arg2[%c0_1, %c0_2] : memref<32x128xf32, #tpu.memory_space<vmem>>, vector<32x128xf32>
    %cst = arith.constant dense<0.000000e+00> : vector<16x128xf32>
    %2 = tpu.matmul %0, %1, %cst {dimension_numbers = #tpu.dot_dimension_numbers<[1], [0], [0], [1], [0, 0, 1, 1], [], []>} : vector<16x32xf32>, vector<32x128xf32>, vector<16x128xf32> -> vector<16x128xf32>
    %c0_3 = arith.constant 0 : index
    %c0_4 = arith.constant 0 : index
    %3 = vector.load %arg3[%c0_3, %c0_4] : memref<1x128xf32, #tpu.memory_space<vmem>>, vector<1x128xf32>
    %4 = vector.broadcast %3 : vector<1x128xf32> to vector<16x128xf32>
    %5 = arith.addf %2, %4 : vector<16x128xf32>
    %6 = math.tanh %5 : vector<16x128xf32>
    %c0_5 = arith.constant 0 : index
    %c0_6 = arith.constant 0 : index
    %7 = vector.load %arg4[%c0_5, %c0_6] : memref<128x32xf32, #tpu.memory_space<vmem>>, vector<128x32xf32>
    %cst_7 = arith.constant dense<0.000000e+00> : vector<16x32xf32>
    %8 = tpu.matmul %6, %7, %cst_7 {dimension_numbers = #tpu.dot_dimension_numbers<[1], [0], [0], [1], [0, 0, 1, 1], [], []>} : vector<16x128xf32>, vector<128x32xf32>, vector<16x32xf32> -> vector<16x32xf32>
    %c0_8 = arith.constant 0 : index
    %c0_9 = arith.constant 0 : index
    %9 = vector.load %arg5[%c0_8, %c0_9] : memref<1x32xf32, #tpu.memory_space<vmem>>, vector<1x32xf32>
    %10 = vector.broadcast %9 : vector<1x32xf32> to vector<16x32xf32>
    %11 = arith.addf %8, %10 : vector<16x32xf32>
    %c0_10 = arith.constant 0 : index
    %c0_11 = arith.constant 0 : index
    %12 = vector.load %arg6[%c0_10, %c0_11] : memref<16x32xf32, #tpu.memory_space<vmem>>, vector<16x32xf32>
    tpu.vector_store %arg6[%c0_10, %c0_11], %11 {strides = array<i32>} : memref<16x32xf32, #tpu.memory_space<vmem>>, vector<16x32xf32>,
    return
  }
  func.func @transform_0(%arg0: i32) -> (i32, i32) {
    %c0_i32 = arith.constant 0 : i32
    %c0_i32_0 = arith.constant 0 : i32
    return %arg0, %c0_i32 : i32, i32
  }
  func.func @transform_1(%arg0: i32) -> (i32, i32) {
    %c0_i32 = arith.constant 0 : i32
    %c0_i32_0 = arith.constant 0 : i32
    %c0_i32_1 = arith.constant 0 : i32
    return %c0_i32, %c0_i32_0 : i32, i32
  }
  func.func @transform_2(%arg0: i32) -> (i32, i32) {
    %c0_i32 = arith.constant 0 : i32
    %c0_i32_0 = arith.constant 0 : i32
    %c0_i32_1 = arith.constant 0 : i32
    return %c0_i32, %c0_i32_0 : i32, i32
  }
  func.func @transform_3(%arg0: i32) -> (i32, i32) {
    %c0_i32 = arith.constant 0 : i32
    %c0_i32_0 = arith.constant 0 : i32
    %c0_i32_1 = arith.constant 0 : i32
    return %c0_i32, %c0_i32_0 : i32, i32
  }
  func.func @transform_4(%arg0: i32) -> (i32, i32) {
    %c0_i32 = arith.constant 0 : i32
    %c0_i32_0 = arith.constant 0 : i32
    %c0_i32_1 = arith.constant 0 : i32
    return %c0_i32, %c0_i32_0 : i32, i32
  }
  func.func @transform_5(%arg0: i32) -> (i32, i32) {
    %c0_i32 = arith.constant 0 : i32
    %c0_i32_0 = arith.constant 0 : i32
    return %arg0, %c0_i32 : i32, i32
  }
}

</mosaic_0001>

<llo_original>
// kernel: tpu_custom_call.1
$region0: #{tpu_custom_call.1}
  #allocation0 [shape = 'u32[]', space=smem, size = 0x4, offset = 0x4, fixed_abs, tag = 'smem constant byte address 0x4 - core index']
  #allocation1 [shape = 'u32[144,128]{1,0:T(1,128)}', space=vmem, size = 0x12000, scoped, tag = 'internal scratch']
  %s0 = inlined_call_operand.vmem [shape: f32[16,32], index: 0, kind: input, shape index: {}]
  %s1 = inlined_call_operand.vmem [shape: f32[32,128], index: 1, kind: input, shape index: {}]
  %s2 = inlined_call_operand.vmem [shape: f32[1,128], index: 2, kind: input, shape index: {}]
  %s3 = inlined_call_operand.vmem [shape: f32[128,32], index: 3, kind: input, shape index: {}]
  %s4 = inlined_call_operand.vmem [shape: f32[1,32], index: 4, kind: input, shape index: {}]
  %s5 = inlined_call_operand.hbm [shape: f32[16,32], index: 5, kind: output, shape index: {}]
  %s6 = sld [smem:[#allocation0]]
  $region30: #{tpu_custom_call.1} parent=0
    _
  %s8 = ssub.s32 1, %s6
  %s9 = scalar_select 0, %s8, %s6
  $region1: #{tpu_custom_call.1} parent=0
    #allocation2 [shape = 'u8[8192]{0}', space=vmem, size = 0x2000, scoped, tag = 'output window, operand 0, single buffered']
    #allocation3 [shape = 's32[1]{0}', space=sflag, size = 0x4, scoped, tag = 'scoped memory for tpu_custom_call.1']
    %10 = vsyncpa [#allocation3], 0
    // Predicated region
    $region2: #{tpu_custom_call.1} parent=1 // pred_check
      _
    $region3: #{tpu_custom_call.1} parent=1 // pred_check_branch
      %12 = sbr.rel (0) target = $region5
    $region4: #{tpu_custom_call.1} parent=1 // pred_region
      _
    $region5: #{tpu_custom_call.1} parent=1 // pred_fallthru
      _
    // Predicated region
    $region6: #{tpu_custom_call.1} parent=1 // pred_check
      _
    $region7: #{tpu_custom_call.1} parent=1 // pred_check_branch
      %14 = sbr.rel (0) target = $region9
    $region8: #{tpu_custom_call.1} parent=1 // pred_region
      _
    $region9: #{tpu_custom_call.1} parent=1 // pred_fallthru
      _
    // Predicated region
    $region10: #{tpu_custom_call.1} parent=1 // pred_check
      _
    $region11: #{tpu_custom_call.1} parent=1 // pred_check_branch
      %16 = sbr.rel (0) target = $region13
    $region12: #{tpu_custom_call.1} parent=1 // pred_region
      _
    $region13: #{tpu_custom_call.1} parent=1 // pred_fallthru
      _
    // Predicated region
    $region14: #{tpu_custom_call.1} parent=1 // pred_check
      _
    $region15: #{tpu_custom_call.1} parent=1 // pred_check_branch
      %18 = sbr.rel (0) target = $region17
    $region16: #{tpu_custom_call.1} parent=1 // pred_region
      _
    $region17: #{tpu_custom_call.1} parent=1 // pred_fallthru
      _
    // Predicated region
    $region18: #{tpu_custom_call.1} parent=1 // pred_check
      _
    $region19: #{tpu_custom_call.1} parent=1 // pred_check_branch
      %20 = sbr.rel (0) target = $region21
    $region20: #{tpu_custom_call.1} parent=1 // pred_region
      _
    $region21: #{tpu_custom_call.1} parent=1 // pred_fallthru
      _
    %v21 = vld [vmem:[%s0] sm:$0xff]
    %v22 = vld [vmem:[%s0 + $0x8] sm:$0xff]
    %v23 = vld [vmem:[%s1] sm:$0xff]
    %v24 = vld [vmem:[%s1 + $0x8] sm:$0xff]
    %v25 = vld [vmem:[%s1 + $0x10] sm:$0xff]
    %v26 = vld [vmem:[%s1 + $0x18] sm:$0xff]
    %v27 = vld [vmem:[%s2] sm:$0x1]
    %v29 = vlaneseq
    %v30 = vshrl.u32 %v29, 7
    %v31 = vsub.s32 0, %v30
    %v32 = vrot.slane %v27, %v31
    %vm34 = vcmask 261120
    %v36 = vsel %vm34, %v21, 0
    %v39 = vsel %vm34, %v22, 0
    %41 = vmatprep.subr.mxu0 0.0
    %42 = vmatpush1.msra.mxu0 %v23
    %43 = vmatprep.subr.mxu0 0.0
    %44 = vmatpush1.msra.mxu0 %v24
    %45 = vmatprep.subr.mxu0 0.0
    %46 = vmatpush1.msra.mxu0 %v25
    %47 = vmatprep.subr.mxu0 0.0
    %48 = vmatpush1.msra.mxu0 %v26
    %49 = vmatprep.subr.mxu0 0.0
    %50 = vmatpush1.msra.mxu0 0.0
    %51 = vmatprep.subr.mxu0 0.0
    %52 = vmatpush1.msra.mxu0 0.0
    %53 = vmatprep.subr.mxu0 0.0
    %54 = vmatpush1.msra.mxu0 0.0
    %55 = vmatprep.subr.mxu0 0.0
    %56 = vmatpush1.msra.mxu0 0.0
    %57 = vmatprep.subr.mxu0 0.0
    %58 = vmatpush1.msra.mxu0 0.0
    %59 = vmatprep.subr.mxu0 0.0
    %60 = vmatpush1.msra.mxu0 0.0
    %61 = vmatprep.subr.mxu0 0.0
    %62 = vmatpush1.msra.mxu0 0.0
    %63 = vmatprep.subr.mxu0 0.0
    %64 = vmatpush1.msra.mxu0 0.0
    %65 = vmatprep.subr.mxu0 0.0
    %66 = vmatpush1.msra.mxu0 0.0
    %67 = vmatprep.subr.mxu0 0.0
    %68 = vmatpush1.msra.mxu0 0.0
    %69 = vmatprep.subr.mxu0 0.0
    %70 = vmatpush1.msra.mxu0 0.0
    %71 = vmatprep.subr.mxu0 0.0
    %72 = vmatpush1.msra.mxu0 0.0
    %73 = vmatprep.subr.mxu0 0.0
    %74 = vmatpush1.msra.mxu0 0.0
    %75 = vmatprep.subr.mxu0 0.0
    %76 = vmatpush1.msra.mxu0 0.0
    %77 = vmatprep.subr.mxu0 0.0
    %78 = vmatpush1.msra.mxu0 0.0
    %79 = vmatprep.subr.mxu0 0.0
    %80 = vmatpush1.msra.mxu0 0.0
    %81 = vmatprep.subr.mxu0 0.0
    %82 = vmatpush1.msra.mxu0 0.0
    %83 = vmatprep.subr.mxu0 0.0
    %84 = vmatpush1.msra.mxu0 0.0
    %85 = vmatprep.subr.mxu0 0.0
    %86 = vmatpush1.msra.mxu0 0.0
    %87 = vmatprep.subr.mxu0 0.0
    %88 = vmatpush1.msra.mxu0 0.0
    %89 = vmatprep.subr.mxu0 0.0
    %90 = vmatpush1.msra.mxu0 0.0
    %91 = vmatprep.subr.mxu0 0.0
    %92 = vmatpush1.msra.mxu0 0.0
    %93 = vmatprep.subr.mxu0 0.0
    %94 = vmatpush1.msra.mxu0 0.0
    %95 = vmatprep.subr.mxu0 0.0
    %96 = vmatpush1.msra.mxu0 0.0
    %97 = vmatprep.subr.mxu0 0.0
    %98 = vmatpush1.msra.mxu0 0.0
    %99 = vmatprep.subr.mxu0 0.0
    %100 = vmatpush1.msra.mxu0 0.0
    %101 = vmatprep.subr.mxu0 0.0
    %102 = vmatpush1.msra.mxu0 0.0
    %103 = vmatprep.subr.mxu0 0.0
    %104 = vmatpush1.msra.mxu0 0.0
    %105 = vmatprep.mubr.f32.mxu0 0.0
    %106 = vmatmul.mubr.f32.gmra.mrb[0].mxu0 %v36
    %v107 = vpop.f32.mrb[0].mxu0
    %v108 = vadd.f32 %v32, %v107
    %v109 = vpop.f32.mrb[0].mxu0
    %110 = vmatprep.mubr.f32.mxu0 0.0
    %111 = vmatmul.mubr.f32.gmra.mrb[0].mxu0 %v39
    %v112 = vpop.f32.mrb[0].mxu0
    %v113 = vadd.f32 %v32, %v112
    %v114 = vpop.f32.mrb[0].mxu0
    %115 = vdwg.mxu0
    %v116 = vtanh.pop %v108
    %v117 = vtanh.pop %v113
    %v118 = vld [vmem:[%s3] sm:$0xff]
    %v119 = vld [vmem:[%s3 + $0x8] sm:$0xff]
    %v120 = vld [vmem:[%s3 + $0x10] sm:$0xff]
    %v121 = vld [vmem:[%s3 + $0x18] sm:$0xff]
    %v122 = vld [vmem:[%s3 + $0x20] sm:$0xff]
    %v123 = vld [vmem:[%s3 + $0x28] sm:$0xff]
    %v124 = vld [vmem:[%s3 + $0x30] sm:$0xff]
    %v125 = vld [vmem:[%s3 + $0x38] sm:$0xff]
    %v126 = vld [vmem:[%s3 + $0x40] sm:$0xff]
    %v127 = vld [vmem:[%s3 + $0x48] sm:$0xff]
    %v128 = vld [vmem:[%s3 + $0x50] sm:$0xff]
    %v129 = vld [vmem:[%s3 + $0x58] sm:$0xff]
    %v130 = vld [vmem:[%s3 + $0x60] sm:$0xff]
    %v131 = vld [vmem:[%s3 + $0x68] sm:$0xff]
    %v132 = vld [vmem:[%s3 + $0x70] sm:$0xff]
    %v133 = vld [vmem:[%s3 + $0x78] sm:$0xff]
    %v134 = vld [vmem:[%s4] sm:$0x1]
    %v136 = vlaneseq
    %v137 = vshrl.u32 %v136, 7
    %v138 = vsub.s32 0, %v137
    %v139 = vrot.slane %v134, %v138
    %141 = vmatprep.subr.mxu0 0.0
    %142 = vmatpush1.msra.mxu0 %v118
    %143 = vmatprep.subr.mxu0 0.0
    %144 = vmatpush1.msra.mxu0 %v119
    %145 = vmatprep.subr.mxu0 0.0
    %146 = vmatpush1.msra.mxu0 %v120
    %147 = vmatprep.subr.mxu0 0.0
    %148 = vmatpush1.msra.mxu0 %v121
    %149 = vmatprep.subr.mxu0 0.0
    %150 = vmatpush1.msra.mxu0 %v122
    %151 = vmatprep.subr.mxu0 0.0
    %152 = vmatpush1.msra.mxu0 %v123
    %153 = vmatprep.subr.mxu0 0.0
    %154 = vmatpush1.msra.mxu0 %v124
    %155 = vmatprep.subr.mxu0 0.0
    %156 = vmatpush1.msra.mxu0 %v125
    %157 = vmatprep.subr.mxu0 0.0
    %158 = vmatpush1.msra.mxu0 %v126
    %159 = vmatprep.subr.mxu0 0.0
    %160 = vmatpush1.msra.mxu0 %v127
    %161 = vmatprep.subr.mxu0 0.0
    %162 = vmatpush1.msra.mxu0 %v128
    %163 = vmatprep.subr.mxu0 0.0
    %164 = vmatpush1.msra.mxu0 %v129
    %165 = vmatprep.subr.mxu0 0.0
    %166 = vmatpush1.msra.mxu0 %v130
    %167 = vmatprep.subr.mxu0 0.0
    %168 = vmatpush1.msra.mxu0 %v131
    %169 = vmatprep.subr.mxu0 0.0
    %170 = vmatpush1.msra.mxu0 %v132
    %171 = vmatprep.subr.mxu0 0.0
    %172 = vmatpush1.msra.mxu0 %v133
    %173 = vmatprep.subr.mxu0 0.0
    %174 = vmatpush1.msra.mxu0 0.0
    %175 = vmatprep.subr.mxu0 0.0
    %176 = vmatpush1.msra.mxu0 0.0
    %177 = vmatprep.subr.mxu0 0.0
    %178 = vmatpush1.msra.mxu0 0.0
    %179 = vmatprep.subr.mxu0 0.0
    %180 = vmatpush1.msra.mxu0 0.0
    %181 = vmatprep.subr.mxu0 0.0
    %182 = vmatpush1.msra.mxu0 0.0
    %183 = vmatprep.subr.mxu0 0.0
    %184 = vmatpush1.msra.mxu0 0.0
    %185 = vmatprep.subr.mxu0 0.0
    %186 = vmatpush1.msra.mxu0 0.0
    %187 = vmatprep.subr.mxu0 0.0
    %188 = vmatpush1.msra.mxu0 0.0
    %189 = vmatprep.subr.mxu0 0.0
    %190 = vmatpush1.msra.mxu0 0.0
    %191 = vmatprep.subr.mxu0 0.0
    %192 = vmatpush1.msra.mxu0 0.0
    %193 = vmatprep.subr.mxu0 0.0
    %194 = vmatpush1.msra.mxu0 0.0
    %195 = vmatprep.subr.mxu0 0.0
    %196 = vmatpush1.msra.mxu0 0.0
    %197 = vmatprep.subr.mxu0 0.0
    %198 = vmatpush1.msra.mxu0 0.0
    %199 = vmatprep.subr.mxu0 0.0
    %200 = vmatpush1.msra.mxu0 0.0
    %201 = vmatprep.subr.mxu0 0.0
    %202 = vmatpush1.msra.mxu0 0.0
    %203 = vmatprep.subr.mxu0 0.0
    %204 = vmatpush1.msra.mxu0 0.0
    %205 = vmatprep.mubr.f32.mxu0 0.0
    %206 = vmatmul.mubr.f32.gmra.mrb[0].mxu0 %v116
    %v207 = vpop.f32.mrb[0].mxu0
    %v208 = vadd.f32 %v139, %v207
    %v209 = vpop.f32.mrb[0].mxu0
    %210 = vmatprep.mubr.f32.mxu0 0.0
    %211 = vmatmul.mubr.f32.gmra.mrb[0].mxu0 %v117
    %v212 = vpop.f32.mrb[0].mxu0
    %v213 = vadd.f32 %v139, %v212
    %v214 = vpop.f32.mrb[0].mxu0
    %215 = vdwg.mxu0
    %216 = vst.msk [vmem:[#allocation2] sm:$0xff] %vm34, %v208
    %217 = vst.msk [vmem:[#allocation2 + $0x8] sm:$0xff] %vm34, %v213
    // Predicated region
    $region22: #{tpu_custom_call.1} parent=1 // pred_check
      _
    $region23: #{tpu_custom_call.1} parent=1 // pred_check_branch
      %219 = sbr.rel (0) target = $region25
    $region24: #{tpu_custom_call.1} parent=1 // pred_region
      %s221 = ssub.s32 256, 256
      %222 = vsyncadd [#allocation3], %s221
      %s223 = sshll.u32 [#allocation2], 4
      %s224 = int_to_ptr.vmem [resolvable:$true] %s223
      %229 = dma.vmem_to_hbm [thread:$0]  %s224, 256, %s5, [#allocation3], 128, 128, 8
    $region25: #{tpu_custom_call.1} parent=1 // pred_fallthru
      _
    // Predicated region
    $region26: #{tpu_custom_call.1} parent=1 // pred_check
      _
    $region27: #{tpu_custom_call.1} parent=1 // pred_check_branch
      %231 = sbr.rel (0) target = $region29
    $region28: #{tpu_custom_call.1} parent=1 // pred_region
      %232 = dma.done [#allocation3], 256
    $region29: #{tpu_custom_call.1} parent=1 // pred_fallthru
      _
    %233 = vsyncpa [#allocation3], 1

</llo_original>
